<compile_context>
chip_gen: v7x
topology: tpu7x:2x2x1
jax: 0.10.0
libtpu: 0.0.40
codegen_flags: <defaults>
</compile_context>

<pallas_src>
import functools

import jax
import jax.numpy as jnp
from jax.experimental import pallas as pl
from jax.experimental.pallas import tpu as pltpu


def _round_up(v, m):
    return -(-v // m) * m


def _dropout(v, keep_prob):
    """Training-mode dropout using the TPU hardware PRNG (seed already set)."""
    bits = pltpu.bitcast(pltpu.prng_random_bits(v.shape), jnp.uint32)
    thresh = jnp.uint32(min(0xFFFFFFFF, int(round(keep_prob * 4294967296.0))))
    keep = bits < thresh
    return jnp.where(keep, v * (1.0 / keep_prob), jnp.zeros_like(v))


def _residual_block_kernel(seed_ref, x_ref, w1_ref, b1_ref, w2_ref, b2_ref,
                           o_ref, flat_x, flat_h,
                           *, NB, L, Cp, K, d, p, L1, S, P0, M,
                           training, keep_prob, compute_dtype):
    """One grid step = NB batch elements, full fused forward pass.

    flat_x: (M+P0, Cp) f32  — per batch b, rows [b*S+p, b*S+p+L) hold x_b,
            everything else is zero (conv1 zero padding).
    flat_h: (M+P0, Cp) cdt  — per batch b, rows [P0+b*S, P0+b*S+L1) hold h_b,
            everything else is zero (conv2 zero padding).
    Because S >= L + 2p, the inter-segment zero rows double as the left
    padding of the next batch, so each conv is just K shifted slab matmuls.
    """
    if training and keep_prob < 1.0:
        pltpu.prng_seed(seed_ref[0] + pl.program_id(0))

    # One-shot zero init of all padding rows.  Safe because the grid runs
    # sequentially on a single TensorCore (dimension_semantics="arbitrary")
    # and the interior rows are fully overwritten every step.
    @pl.when(pl.program_id(0) == 0)
    def _init():
        flat_x[...] = jnp.zeros(flat_x.shape, flat_x.dtype)
        flat_h[...] = jnp.zeros(flat_h.shape, flat_h.dtype)

    # Scatter this step's inputs into their padded positions (L rows/batch).
    for b in range(NB):
        flat_x[b * S + p: b * S + p + L, :] = x_ref[b]

    # ---- conv1: K per-tap shifted slab matmuls, f32 accumulation ------------
    acc = jnp.zeros((M, Cp), jnp.float32)
    for t in range(K):
        tap = flat_x[t * d: t * d + M, :].astype(compute_dtype)
        acc = acc + jnp.dot(tap, w1_ref[t], preferred_element_type=jnp.float32)
    h = jnp.maximum(acc + b1_ref[...], 0.0)
    if training and keep_prob < 1.0:
        h = _dropout(h, keep_prob)

    # Rows beyond L1 within each segment act as conv2's zero padding → mask,
    # then ONE aligned slab store into the hidden scratch.
    row = jax.lax.broadcasted_iota(jnp.int32, (M, 1), 0)
    h = jnp.where((row % S) < L1, h, 0.0)
    flat_h[P0:P0 + M, :] = h.astype(compute_dtype)

    # ---- conv2: K per-tap shifted slab matmuls, f32 accumulation ------------
    acc2 = jnp.zeros((M, Cp), jnp.float32)
    for t in range(K):
        s0 = P0 - p + t * d                      # >= 0 since P0 >= p
        acc2 = acc2 + jnp.dot(flat_h[s0:s0 + M, :], w2_ref[t],
                              preferred_element_type=jnp.float32)
    y = acc2 + b2_ref[...]

    # ---- residual add (PyTorch broadcast over length), ReLU, dropout --------
    out = y.reshape(NB, S, Cp) + x_ref[...]      # (NB,S,Cp) + (NB,1,Cp)
    out = jnp.maximum(out, 0.0)
    if training and keep_prob < 1.0:
        out = _dropout(out, keep_prob)
    o_ref[...] = out.astype(o_ref.dtype)


def _vmem_estimate(NB, S, P0, Cp, K, L, cdt_bytes):
    M = NB * S
    scratch = (M + P0) * Cp * (4 + cdt_bytes)              # flat_x + flat_h
    io = 2 * NB * (L + S) * Cp * 4                         # x/out, double-buffered
    weights = 2 * 2 * (K * Cp * Cp * cdt_bytes + Cp * 4)   # w1/w2 + biases, 2 bufs
    live = 4 * M * Cp * 4                                  # acc/h/y/out temporaries
    return scratch + io + weights + live


def _pick_block_batch(N, S, P0, Cp, K, L, cdt_bytes,
                      target_m=256, budget=24 << 20):
    """Largest NB with M = NB*S >= target (MXU fill) under a VMEM budget that
    is safe on every generation (v7x: 64 MiB physical / 32 MiB scoped)."""
    nb = 1
    for cand in range(1, N + 1):
        if _vmem_estimate(cand, S, P0, Cp, K, L, cdt_bytes) > budget:
            break
        nb = cand
        if cand * S >= target_m:
            break
    return nb


def residual_block_forward(x_ncl, w1, b1, w2, b2, *, dilation, training=False,
                           dropout_seed=0, block_batch=None,
                           compute_dtype=jnp.bfloat16):
    """x_ncl: (N, C_in, L) float32, PyTorch NCL layout. Returns (N, C_out, L2)."""
    N, C_in, L = x_ncl.shape
    C_out, C_in_w, K = w1.shape
    assert C_in_w == C_in
    d = int(dilation)
    p = (K - 1) * d                   # PyTorch padding=(kernel_size-1)*dilation
    L1 = L + p                        # conv1 output length
    L2 = L1 + p                       # conv2 output length (= L + 2p)
    # PyTorch's `out += residual` only broadcasts when L == 1 and C_in == C_out.
    assert L == 1 and C_in == C_out, (
        "residual add must be broadcastable exactly as in the PyTorch module")

    LANE = 128
    Cp = _round_up(max(C_in, C_out), LANE)    # lane-dense channel count
    S = _round_up(L + 2 * p, 8)               # 8-aligned per-batch row stride
    P0 = _round_up(p, 8)                      # 8-aligned left pad of hidden slab
    cdt_bytes = jnp.dtype(compute_dtype).itemsize

    if block_batch is None:
        block_batch = _pick_block_batch(N, S, P0, Cp, K, L, cdt_bytes)
    NB = int(block_batch)
    Npad = _round_up(N, NB)
    M = NB * S

    x_nlc = jnp.transpose(x_ncl, (0, 2, 1)).astype(jnp.float32)       # (N, L, C_in)
    x_nlc = jnp.pad(x_nlc, ((0, Npad - N), (0, 0), (0, Cp - C_in)))   # (Npad, L, Cp)

    def prep_w(w, cin):               # (cout, cin, K) -> (K, Cp, Cp), tap-major
        wt = jnp.transpose(w, (2, 1, 0)).astype(jnp.float32)          # (K, cin, cout)
        wt = jnp.pad(wt, ((0, 0), (0, Cp - cin), (0, Cp - C_out)))
        return wt.astype(compute_dtype)

    w1_f, w2_f = prep_w(w1, C_in), prep_w(w2, C_out)
    b1_p = jnp.pad(b1.astype(jnp.float32), (0, Cp - C_out))[None, :]  # (1, Cp)
    b2_p = jnp.pad(b2.astype(jnp.float32), (0, Cp - C_out))[None, :]
    seed_arr = jnp.asarray([dropout_seed], jnp.int32)

    kernel = functools.partial(
        _residual_block_kernel,
        NB=NB, L=L, Cp=Cp, K=K, d=d, p=p, L1=L1, S=S, P0=P0, M=M,
        training=training, keep_prob=0.8, compute_dtype=compute_dtype)

    est_vmem = _vmem_estimate(NB, S, P0, Cp, K, L, cdt_bytes)
    cp_kwargs = dict(dimension_semantics=("arbitrary",))
    if est_vmem > (24 << 20):
        cp_kwargs["vmem_limit_bytes"] = int(min(100 << 20, 2 * est_vmem))

    out_nlc = pl.pallas_call(
        kernel,
        out_shape=jax.ShapeDtypeStruct((Npad, S, Cp), jnp.float32),
        grid_spec=pltpu.PrefetchScalarGridSpec(
            num_scalar_prefetch=1,                        # per-call dropout seed
            grid=(Npad // NB,),
            in_specs=[
                pl.BlockSpec((NB, L, Cp), lambda n, seed: (n, 0, 0)),
                pl.BlockSpec((K, Cp, Cp), lambda n, seed: (0, 0, 0)),   # invariant
                pl.BlockSpec((1, Cp), lambda n, seed: (0, 0)),
                pl.BlockSpec((K, Cp, Cp), lambda n, seed: (0, 0, 0)),   # invariant
                pl.BlockSpec((1, Cp), lambda n, seed: (0, 0)),
            ],
            out_specs=pl.BlockSpec((NB, S, Cp), lambda n, seed: (n, 0, 0)),
            scratch_shapes=[
                pltpu.VMEM((M + P0, Cp), jnp.float32),     # padded input slab
                pltpu.VMEM((M + P0, Cp), compute_dtype),   # padded hidden slab
            ],
        ),
        compiler_params=pltpu.CompilerParams(**cp_kwargs),
    )(seed_arr, x_nlc, w1_f, b1_p, w2_f, b2_p)

    # Valid rows are the first L2 of each segment; slice and go back to NCL.
    return jnp.transpose(out_nlc[:N, :L2, :C_out], (0, 2, 1))


def _reference_eval(x, w1, b1, w2, b2, dilation):
    """Pure-JAX reference of the PyTorch module in eval mode (dropout = id)."""
    p = (w1.shape[2] - 1) * dilation

    def conv(inp, w, b):
        y = jax.lax.conv_general_dilated(
            inp, w, window_strides=(1,), padding=[(p, p)],
            rhs_dilation=(dilation,), dimension_numbers=('NCH', 'OIH', 'NCH'))
        return y + b[None, :, None]

    out = jax.nn.relu(conv(x, w1, b1))
    out = conv(out, w2, b2)
    out = out + x                     # same broadcast as torch `out += residual`
    return jax.nn.relu(out)


if __name__ == "__main__":
    # TODO(synk): PyTorch training-mode dropout RNG stream is not reproducible;
    # the demo runs eval mode (dropout = identity). In-kernel PRNG dropout with
    # a per-call seed is available via training=True / dropout_seed=...
    key = jax.random.PRNGKey(0)
    N, C_in, C_out, L = 2, 32, 32, 1   # L=1 so the module's residual add is valid
    K, dilation = 3, 2

    k1, k2, k3, k4, k5 = jax.random.split(key, 5)
    bound1 = 1.0 / (C_in * K) ** 0.5
    bound2 = 1.0 / (C_out * K) ** 0.5
    w1 = jax.random.uniform(k1, (C_out, C_in, K), jnp.float32, -bound1, bound1)
    b1 = jax.random.uniform(k2, (C_out,), jnp.float32, -bound1, bound1)
    w2 = jax.random.uniform(k3, (C_out, C_out, K), jnp.float32, -bound2, bound2)
    b2 = jax.random.uniform(k4, (C_out,), jnp.float32, -bound2, bound2)
    x = jax.random.normal(k5, (N, C_in, L), jnp.float32)

    ref = _reference_eval(x, w1, b1, w2, b2, dilation)

    # Exact-path check (f32 MXU inputs).
    out_f32 = residual_block_forward(x, w1, b1, w2, b2, dilation=dilation,
                                     training=False,
                                     compute_dtype=jnp.float32)
    out_f32 = jax.block_until_ready(out_f32)
    assert out_f32.shape == ref.shape, (out_f32.shape, ref.shape)
    if not jnp.allclose(out_f32, ref, atol=1e-4, rtol=1e-4):
        raise SystemExit("KERNEL_MISMATCH")

    # Default fast path (bf16 MXU inputs, f32 accumulation) -> loose tolerance.
    out = residual_block_forward(x, w1, b1, w2, b2, dilation=dilation,
                                 training=False)
    out = jax.block_until_ready(out)
    assert out.shape == ref.shape, (out.shape, ref.shape)
    if not jnp.allclose(out, ref, atol=3e-2, rtol=3e-2):
        raise SystemExit("KERNEL_MISMATCH")

    print("KERNEL_OK")
</pallas_src>

<mosaic_0001>
module attributes {stable_mosaic.version = 11 : i64} {
  func.func @_residual_block_kernel(%arg0: i32, %arg1: memref<1xi32, #tpu.memory_space<smem>>, %arg2: memref<2x1x128xf32, #tpu.memory_space<vmem>>, %arg3: memref<3x128x128xf32, #tpu.memory_space<vmem>>, %arg4: memref<1x128xf32, #tpu.memory_space<vmem>>, %arg5: memref<3x128x128xf32, #tpu.memory_space<vmem>>, %arg6: memref<1x128xf32, #tpu.memory_space<vmem>>, %arg7: memref<2x16x128xf32, #tpu.memory_space<vmem>>, %arg8: memref<40x128xf32, #tpu.memory_space<vmem>>, %arg9: memref<40x128xf32, #tpu.memory_space<vmem>>) attributes {dimension_semantics = [#tpu.dimension_semantics<arbitrary>], iteration_bounds = array<i64: 1>, scalar_prefetch = 1 : i64, scratch_operands = 2 : i64, tpu.core_type = #tpu.core_type<tc>, window_params = [{transform_indices = @transform_0, window_bounds = array<i64: 2, 1, 128>}, {pipeline_mode = #tpu.pipeline_mode<synchronous>, transform_indices = @transform_1, window_bounds = array<i64: 3, 128, 128>}, {pipeline_mode = #tpu.pipeline_mode<synchronous>, transform_indices = @transform_2, window_bounds = array<i64: 1, 128>}, {pipeline_mode = #tpu.pipeline_mode<synchronous>, transform_indices = @transform_3, window_bounds = array<i64: 3, 128, 128>}, {pipeline_mode = #tpu.pipeline_mode<synchronous>, transform_indices = @transform_4, window_bounds = array<i64: 1, 128>}, {transform_indices = @transform_5, window_bounds = array<i64: 2, 16, 128>}]} {
    %c0_i32 = arith.constant 0 : i32
    %0 = arith.cmpi eq, %arg0, %c0_i32 : i32
    %1 = arith.extui %0 : i1 to i32
    %c0_i32_0 = arith.constant 0 : i32
    %2 = arith.cmpi ne, %1, %c0_i32_0 : i32
    scf.if %2 {
      %cst_60 = arith.constant 0.000000e+00 : f32
      %80 = vector.broadcast %cst_60 : f32 to vector<40x128xf32>
      %c0_61 = arith.constant 0 : index
      %c0_62 = arith.constant 0 : index
      %81 = vector.load %arg8[%c0_61, %c0_62] : memref<40x128xf32, #tpu.memory_space<vmem>>, vector<40x128xf32>
      tpu.vector_store %arg8[%c0_61, %c0_62], %80 {strides = array<i32>} : memref<40x128xf32, #tpu.memory_space<vmem>>, vector<40x128xf32>,
      %cst_63 = arith.constant 0.000000e+00 : f32
      %82 = vector.broadcast %cst_63 : f32 to vector<40x128xf32>
      %c0_64 = arith.constant 0 : index
      %c0_65 = arith.constant 0 : index
      %83 = vector.load %arg9[%c0_64, %c0_65] : memref<40x128xf32, #tpu.memory_space<vmem>>, vector<40x128xf32>
      tpu.vector_store %arg9[%c0_64, %c0_65], %82 {strides = array<i32>} : memref<40x128xf32, #tpu.memory_space<vmem>>, vector<40x128xf32>,
    } else {
    }
    %c0 = arith.constant 0 : index
    %c0_1 = arith.constant 0 : index
    %c0_2 = arith.constant 0 : index
    %3 = vector.load %arg2[%c0, %c0_1, %c0_2] : memref<2x1x128xf32, #tpu.memory_space<vmem>>, vector<1x1x128xf32>
    %4 = vector.shape_cast %3 : vector<1x1x128xf32> to vector<1x128xf32>
    %c4 = arith.constant 4 : index
    %c0_3 = arith.constant 0 : index
    %5 = vector.load %arg8[%c4, %c0_3] : memref<40x128xf32, #tpu.memory_space<vmem>>, vector<1x128xf32>
    tpu.vector_store %arg8[%c4, %c0_3], %4 {strides = array<i32>} : memref<40x128xf32, #tpu.memory_space<vmem>>, vector<1x128xf32>,
    %c1 = arith.constant 1 : index
    %c0_4 = arith.constant 0 : index
    %c0_5 = arith.constant 0 : index
    %6 = vector.load %arg2[%c1, %c0_4, %c0_5] : memref<2x1x128xf32, #tpu.memory_space<vmem>>, vector<1x1x128xf32>
    %7 = vector.shape_cast %6 : vector<1x1x128xf32> to vector<1x128xf32>
    %c20 = arith.constant 20 : index
    %c0_6 = arith.constant 0 : index
    %8 = vector.load %arg8[%c20, %c0_6] : memref<40x128xf32, #tpu.memory_space<vmem>>, vector<1x128xf32>
    tpu.vector_store %arg8[%c20, %c0_6], %7 {strides = array<i32>} : memref<40x128xf32, #tpu.memory_space<vmem>>, vector<1x128xf32>,
    %cst = arith.constant 0.000000e+00 : f32
    %9 = vector.broadcast %cst : f32 to vector<32x128xf32>
    %c0_7 = arith.constant 0 : index
    %c0_8 = arith.constant 0 : index
    %10 = vector.load %arg8[%c0_7, %c0_8] : memref<40x128xf32, #tpu.memory_space<vmem>>, vector<32x128xf32>
    %c0_9 = arith.constant 0 : index
    %c0_10 = arith.constant 0 : index
    %c0_11 = arith.constant 0 : index
    %11 = vector.load %arg3[%c0_9, %c0_10, %c0_11] : memref<3x128x128xf32, #tpu.memory_space<vmem>>, vector<1x128x128xf32>
    %12 = vector.shape_cast %11 : vector<1x128x128xf32> to vector<128x128xf32>
    %cst_12 = arith.constant dense<0.000000e+00> : vector<32x128xf32>
    %13 = tpu.matmul %10, %12, %cst_12 {dimension_numbers = #tpu.dot_dimension_numbers<[1], [0], [0], [1], [0, 0, 1, 1], [], []>} : vector<32x128xf32>, vector<128x128xf32>, vector<32x128xf32> -> vector<32x128xf32>
    %14 = arith.addf %9, %13 : vector<32x128xf32>
    %c2 = arith.constant 2 : index
    %c0_13 = arith.constant 0 : index
    %15 = vector.load %arg8[%c2, %c0_13] : memref<40x128xf32, #tpu.memory_space<vmem>>, vector<32x128xf32>
    %c1_14 = arith.constant 1 : index
    %c0_15 = arith.constant 0 : index
    %c0_16 = arith.constant 0 : index
    %16 = vector.load %arg3[%c1_14, %c0_15, %c0_16] : memref<3x128x128xf32, #tpu.memory_space<vmem>>, vector<1x128x128xf32>
    %17 = vector.shape_cast %16 : vector<1x128x128xf32> to vector<128x128xf32>
    %cst_17 = arith.constant dense<0.000000e+00> : vector<32x128xf32>
    %18 = tpu.matmul %15, %17, %cst_17 {dimension_numbers = #tpu.dot_dimension_numbers<[1], [0], [0], [1], [0, 0, 1, 1], [], []>} : vector<32x128xf32>, vector<128x128xf32>, vector<32x128xf32> -> vector<32x128xf32>
    %19 = arith.addf %14, %18 : vector<32x128xf32>
    %c4_18 = arith.constant 4 : index
    %c0_19 = arith.constant 0 : index
    %20 = vector.load %arg8[%c4_18, %c0_19] : memref<40x128xf32, #tpu.memory_space<vmem>>, vector<32x128xf32>
    %c2_20 = arith.constant 2 : index
    %c0_21 = arith.constant 0 : index
    %c0_22 = arith.constant 0 : index
    %21 = vector.load %arg3[%c2_20, %c0_21, %c0_22] : memref<3x128x128xf32, #tpu.memory_space<vmem>>, vector<1x128x128xf32>
    %22 = vector.shape_cast %21 : vector<1x128x128xf32> to vector<128x128xf32>
    %cst_23 = arith.constant dense<0.000000e+00> : vector<32x128xf32>
    %23 = tpu.matmul %20, %22, %cst_23 {dimension_numbers = #tpu.dot_dimension_numbers<[1], [0], [0], [1], [0, 0, 1, 1], [], []>} : vector<32x128xf32>, vector<128x128xf32>, vector<32x128xf32> -> vector<32x128xf32>
    %24 = arith.addf %19, %23 : vector<32x128xf32>
    %c0_24 = arith.constant 0 : index
    %c0_25 = arith.constant 0 : index
    %25 = vector.load %arg4[%c0_24, %c0_25] : memref<1x128xf32, #tpu.memory_space<vmem>>, vector<1x128xf32>
    %26 = vector.broadcast %25 : vector<1x128xf32> to vector<32x128xf32>
    %27 = arith.addf %24, %26 : vector<32x128xf32>
    %cst_26 = arith.constant 0.000000e+00 : f32
    %28 = vector.broadcast %cst_26 : f32 to vector<32x128xf32>
    %29 = arith.maximumf %27, %28 : vector<32x128xf32>
    %30 = tpu.iota {dimensions = array<i32: 0>} : vector<32x1xi32>
    %c16_i32 = arith.constant 16 : i32
    %c0_i32_27 = arith.constant 0 : i32
    %31 = arith.cmpi eq, %c16_i32, %c0_i32_27 : i32
    %c1_i32 = arith.constant 1 : i32
    %32 = arith.select %31, %c1_i32, %c16_i32 : i32
    %33 = vector.broadcast %32 : i32 to vector<32x1xi32>
    %34 = arith.remsi %30, %33 : vector<32x1xi32>
    %c0_i32_28 = arith.constant 0 : i32
    %35 = vector.broadcast %c0_i32_28 : i32 to vector<32x1xi32>
    %36 = arith.cmpi ne, %34, %35 : vector<32x1xi32>
    %c0_i32_29 = arith.constant 0 : i32
    %37 = vector.broadcast %c0_i32_29 : i32 to vector<32x1xi32>
    %38 = arith.cmpi slt, %34, %37 : vector<32x1xi32>
    %c0_i32_30 = arith.constant 0 : i32
    %39 = arith.cmpi slt, %32, %c0_i32_30 : i32
    %40 = vector.broadcast %39 : i1 to vector<32x1xi1>
    %41 = vector.broadcast %40 : vector<32x1xi1> to vector<32x1xi1>
    %42 = arith.xori %38, %41 : vector<32x1xi1>
    %43 = arith.andi %42, %36 : vector<32x1xi1>
    %44 = vector.broadcast %32 : i32 to vector<32x1xi32>
    %45 = arith.addi %34, %44 : vector<32x1xi32>
    %46 = arith.select %43, %45, %34 : vector<32x1xi1>, vector<32x1xi32>
    %c5_i32 = arith.constant 5 : i32
    %47 = vector.broadcast %c5_i32 : i32 to vector<32x1xi32>
    %48 = arith.cmpi slt, %46, %47 : vector<32x1xi32>
    %cst_31 = arith.constant 0.000000e+00 : f32
    %49 = vector.shape_cast %48 : vector<32x1xi1> to vector<32x1xi1>
    %50 = vector.broadcast %49 : vector<32x1xi1> to vector<32x128xi1>
    %51 = vector.broadcast %cst_31 : f32 to vector<32x128xf32>
    %52 = arith.select %50, %29, %51 : vector<32x128xi1>, vector<32x128xf32>
    %c8 = arith.constant 8 : index
    %c0_32 = arith.constant 0 : index
    %53 = vector.load %arg9[%c8, %c0_32] : memref<40x128xf32, #tpu.memory_space<vmem>>, vector<32x128xf32>
    tpu.vector_store %arg9[%c8, %c0_32], %52 {strides = array<i32>} : memref<40x128xf32, #tpu.memory_space<vmem>>, vector<32x128xf32>,
    %cst_33 = arith.constant 0.000000e+00 : f32
    %54 = vector.broadcast %cst_33 : f32 to vector<32x128xf32>
    %c4_34 = arith.constant 4 : index
    %c0_35 = arith.constant 0 : index
    %55 = vector.load %arg9[%c4_34, %c0_35] : memref<40x128xf32, #tpu.memory_space<vmem>>, vector<32x128xf32>
    %c0_36 = arith.constant 0 : index
    %c0_37 = arith.constant 0 : index
    %c0_38 = arith.constant 0 : index
    %56 = vector.load %arg5[%c0_36, %c0_37, %c0_38] : memref<3x128x128xf32, #tpu.memory_space<vmem>>, vector<1x128x128xf32>
    %57 = vector.shape_cast %56 : vector<1x128x128xf32> to vector<128x128xf32>
    %cst_39 = arith.constant dense<0.000000e+00> : vector<32x128xf32>
    %58 = tpu.matmul %55, %57, %cst_39 {dimension_numbers = #tpu.dot_dimension_numbers<[1], [0], [0], [1], [0, 0, 1, 1], [], []>} : vector<32x128xf32>, vector<128x128xf32>, vector<32x128xf32> -> vector<32x128xf32>
    %59 = arith.addf %54, %58 : vector<32x128xf32>
    %c6 = arith.constant 6 : index
    %c0_40 = arith.constant 0 : index
    %60 = vector.load %arg9[%c6, %c0_40] : memref<40x128xf32, #tpu.memory_space<vmem>>, vector<32x128xf32>
    %c1_41 = arith.constant 1 : index
    %c0_42 = arith.constant 0 : index
    %c0_43 = arith.constant 0 : index
    %61 = vector.load %arg5[%c1_41, %c0_42, %c0_43] : memref<3x128x128xf32, #tpu.memory_space<vmem>>, vector<1x128x128xf32>
    %62 = vector.shape_cast %61 : vector<1x128x128xf32> to vector<128x128xf32>
    %cst_44 = arith.constant dense<0.000000e+00> : vector<32x128xf32>
    %63 = tpu.matmul %60, %62, %cst_44 {dimension_numbers = #tpu.dot_dimension_numbers<[1], [0], [0], [1], [0, 0, 1, 1], [], []>} : vector<32x128xf32>, vector<128x128xf32>, vector<32x128xf32> -> vector<32x128xf32>
    %64 = arith.addf %59, %63 : vector<32x128xf32>
    %c8_45 = arith.constant 8 : index
    %c0_46 = arith.constant 0 : index
    %65 = vector.load %arg9[%c8_45, %c0_46] : memref<40x128xf32, #tpu.memory_space<vmem>>, vector<32x128xf32>
    %c2_47 = arith.constant 2 : index
    %c0_48 = arith.constant 0 : index
    %c0_49 = arith.constant 0 : index
    %66 = vector.load %arg5[%c2_47, %c0_48, %c0_49] : memref<3x128x128xf32, #tpu.memory_space<vmem>>, vector<1x128x128xf32>
    %67 = vector.shape_cast %66 : vector<1x128x128xf32> to vector<128x128xf32>
    %cst_50 = arith.constant dense<0.000000e+00> : vector<32x128xf32>
    %68 = tpu.matmul %65, %67, %cst_50 {dimension_numbers = #tpu.dot_dimension_numbers<[1], [0], [0], [1], [0, 0, 1, 1], [], []>} : vector<32x128xf32>, vector<128x128xf32>, vector<32x128xf32> -> vector<32x128xf32>
    %69 = arith.addf %64, %68 : vector<32x128xf32>
    %c0_51 = arith.constant 0 : index
    %c0_52 = arith.constant 0 : index
    %70 = vector.load %arg6[%c0_51, %c0_52] : memref<1x128xf32, #tpu.memory_space<vmem>>, vector<1x128xf32>
    %71 = vector.broadcast %70 : vector<1x128xf32> to vector<32x128xf32>
    %72 = arith.addf %69, %71 : vector<32x128xf32>
    %73 = vector.shape_cast %72 : vector<32x128xf32> to vector<2x16x128xf32>
    %c0_53 = arith.constant 0 : index
    %c0_54 = arith.constant 0 : index
    %c0_55 = arith.constant 0 : index
    %74 = vector.load %arg2[%c0_53, %c0_54, %c0_55] : memref<2x1x128xf32, #tpu.memory_space<vmem>>, vector<2x1x128xf32>
    %75 = vector.broadcast %74 : vector<2x1x128xf32> to vector<2x16x128xf32>
    %76 = arith.addf %73, %75 : vector<2x16x128xf32>
    %cst_56 = arith.constant 0.000000e+00 : f32
    %77 = vector.broadcast %cst_56 : f32 to vector<2x16x128xf32>
    %78 = arith.maximumf %76, %77 : vector<2x16x128xf32>
    %c0_57 = arith.constant 0 : index
    %c0_58 = arith.constant 0 : index
    %c0_59 = arith.constant 0 : index
    %79 = vector.load %arg7[%c0_57, %c0_58, %c0_59] : memref<2x16x128xf32, #tpu.memory_space<vmem>>, vector<2x16x128xf32>
    tpu.vector_store %arg7[%c0_57, %c0_58, %c0_59], %78 {strides = array<i32>} : memref<2x16x128xf32, #tpu.memory_space<vmem>>, vector<2x16x128xf32>,
    return
  }
  func.func @transform_0(%arg0: i32, %arg1: memref<1xi32, #tpu.memory_space<smem>>) -> (i32, i32, i32) {
    %c0_i32 = arith.constant 0 : i32
    %c0_i32_0 = arith.constant 0 : i32
    %c0_i32_1 = arith.constant 0 : i32
    return %arg0, %c0_i32, %c0_i32_0 : i32, i32, i32
  }
  func.func @transform_1(%arg0: i32, %arg1: memref<1xi32, #tpu.memory_space<smem>>) -> (i32, i32, i32) {
    %c0_i32 = arith.constant 0 : i32
    %c0_i32_0 = arith.constant 0 : i32
    %c0_i32_1 = arith.constant 0 : i32
    %c0_i32_2 = arith.constant 0 : i32
    return %c0_i32, %c0_i32_0, %c0_i32_1 : i32, i32, i32
  }
  func.func @transform_2(%arg0: i32, %arg1: memref<1xi32, #tpu.memory_space<smem>>) -> (i32, i32) {
    %c0_i32 = arith.constant 0 : i32
    %c0_i32_0 = arith.constant 0 : i32
    %c0_i32_1 = arith.constant 0 : i32
    return %c0_i32, %c0_i32_0 : i32, i32
  }
  func.func @transform_3(%arg0: i32, %arg1: memref<1xi32, #tpu.memory_space<smem>>) -> (i32, i32, i32) {
    %c0_i32 = arith.constant 0 : i32
    %c0_i32_0 = arith.constant 0 : i32
    %c0_i32_1 = arith.constant 0 : i32
    %c0_i32_2 = arith.constant 0 : i32
    return %c0_i32, %c0_i32_0, %c0_i32_1 : i32, i32, i32
  }
  func.func @transform_4(%arg0: i32, %arg1: memref<1xi32, #tpu.memory_space<smem>>) -> (i32, i32) {
    %c0_i32 = arith.constant 0 : i32
    %c0_i32_0 = arith.constant 0 : i32
    %c0_i32_1 = arith.constant 0 : i32
    return %c0_i32, %c0_i32_0 : i32, i32
  }
  func.func @transform_5(%arg0: i32, %arg1: memref<1xi32, #tpu.memory_space<smem>>) -> (i32, i32, i32) {
    %c0_i32 = arith.constant 0 : i32
    %c0_i32_0 = arith.constant 0 : i32
    %c0_i32_1 = arith.constant 0 : i32
    return %arg0, %c0_i32, %c0_i32_0 : i32, i32, i32
  }
}

</mosaic_0001>

<llo_original>
// kernel: tpu_custom_call.1
$region0: #{tpu_custom_call.1}
  #allocation0 [shape = 'u32[]', space=smem, size = 0x4, offset = 0x4, fixed_abs, tag = 'smem constant byte address 0x4 - core index']
  #allocation1 [shape = 'u32[144,128]{1,0:T(1,128)}', space=vmem, size = 0x12000, scoped, tag = 'internal scratch']
  #allocation2 [shape = 'f32[40,128]{1,0:T(8,128)}', space=vmem, size = 0x5000, scoped, tag = 'scratch operand']
  #allocation3 [shape = 'f32[40,128]{1,0:T(8,128)}', space=vmem, size = 0x5000, scoped, tag = 'scratch operand']
  #allocation4 [shape = 's32[1]{0}', space=sflag, size = 0x4, scoped, tag = 'scoped memory for tpu_custom_call.1']
  #allocation5 [shape = 's32[1]{0:T(128)S(6)}', space=smem, size = 0x200, scoped, tag = 'prefetched SMEM operand 0']
  %s0 = inlined_call_operand.<no memory space> [shape: s32[1], index: 0, kind: input, shape index: {}]
  %s1 = inlined_call_operand.vmem [shape: f32[2,1,128], index: 1, kind: input, shape index: {}]
  %s2 = inlined_call_operand.hbm [shape: f32[3,128,128], index: 2, kind: input, shape index: {}]
  %s3 = inlined_call_operand.vmem [shape: f32[1,128], index: 3, kind: input, shape index: {}]
  %s4 = inlined_call_operand.hbm [shape: f32[3,128,128], index: 4, kind: input, shape index: {}]
  %s5 = inlined_call_operand.vmem [shape: f32[1,128], index: 5, kind: input, shape index: {}]
  %s6 = inlined_call_operand.hbm [shape: f32[2,16,128], index: 6, kind: output, shape index: {}]
  %s7 = sld [smem:[#allocation0]]
  $region42: #{tpu_custom_call.1} parent=0
    _
  %s9 = ssub.s32 1, %s7
  %s10 = scalar_select 0, %s9, %s7
  %11 = sst [smem:[#allocation5]] %s0
  $region1: #{tpu_custom_call.1} parent=0
    #allocation6 [shape = 'u8[196608]{0}', space=vmem, size = 0x30000, scoped, tag = 'input window, operand 2, single buffered']
    #allocation7 [shape = 's32[1]{0}', space=sflag, size = 0x4, scoped, tag = 'scoped memory for tpu_custom_call.1']
    #allocation8 [shape = 's32[1]{0}', space=sflag, size = 0x4, scoped, tag = 'scoped memory for tpu_custom_call.1']
    #allocation9 [shape = 'u8[196608]{0}', space=vmem, size = 0x30000, scoped, tag = 'input window, operand 4, single buffered']
    #allocation10 [shape = 's32[1]{0}', space=sflag, size = 0x4, scoped, tag = 'scoped memory for tpu_custom_call.1']
    #allocation11 [shape = 'u8[16384]{0}', space=vmem, size = 0x4000, scoped, tag = 'output window, operand 0, single buffered']
    %12 = vsyncpa [#allocation7], 0
    %13 = vsyncpa [#allocation10], 0
    %14 = vsyncpa [#allocation8], 0
    // Predicated region
    $region2: #{tpu_custom_call.1} parent=1 // pred_check
      _
    $region3: #{tpu_custom_call.1} parent=1 // pred_check_branch
      %16 = sbr.rel (0) target = $region5
    $region4: #{tpu_custom_call.1} parent=1 // pred_region
      _
    $region5: #{tpu_custom_call.1} parent=1 // pred_fallthru
      _
    // Predicated region
    $region6: #{tpu_custom_call.1} parent=1 // pred_check
      _
    $region7: #{tpu_custom_call.1} parent=1 // pred_check_branch
      %18 = sbr.rel (0) target = $region9
    $region8: #{tpu_custom_call.1} parent=1 // pred_region
      %s20 = ssub.s32 6144, 6144
      %21 = vsyncadd [#allocation7], %s20
      %s22 = sshll.u32 [#allocation6], 4
      %s23 = int_to_ptr.vmem [resolvable:$true] %s22
      %28 = dma.hbm_to_vmem [thread:$0]  %s2, 6144, %s23, [#allocation7], 128, 128, 8
    $region9: #{tpu_custom_call.1} parent=1 // pred_fallthru
      _
    // Predicated region
    $region10: #{tpu_custom_call.1} parent=1 // pred_check
      _
    $region11: #{tpu_custom_call.1} parent=1 // pred_check_branch
      %30 = sbr.rel (0) target = $region13
    $region12: #{tpu_custom_call.1} parent=1 // pred_region
      _
    $region13: #{tpu_custom_call.1} parent=1 // pred_fallthru
      _
    // Predicated region
    $region14: #{tpu_custom_call.1} parent=1 // pred_check
      _
    $region15: #{tpu_custom_call.1} parent=1 // pred_check_branch
      %32 = sbr.rel (0) target = $region17
    $region16: #{tpu_custom_call.1} parent=1 // pred_region
      %s34 = ssub.s32 6144, 6144
      %35 = vsyncadd [#allocation10], %s34
      %s36 = sshll.u32 [#allocation9], 4
      %s37 = int_to_ptr.vmem [resolvable:$true] %s36
      %42 = dma.hbm_to_vmem [thread:$0]  %s4, 6144, %s37, [#allocation10], 128, 128, 8
    $region17: #{tpu_custom_call.1} parent=1 // pred_fallthru
      _
    // Predicated region
    $region18: #{tpu_custom_call.1} parent=1 // pred_check
      _
    $region19: #{tpu_custom_call.1} parent=1 // pred_check_branch
      %44 = sbr.rel (0) target = $region21
    $region20: #{tpu_custom_call.1} parent=1 // pred_region
      _
    $region21: #{tpu_custom_call.1} parent=1 // pred_fallthru
      _
    // Predicated region
    $region22: #{tpu_custom_call.1} parent=1 // pred_check
      _
    $region23: #{tpu_custom_call.1} parent=1 // pred_check_branch
      %46 = sbr.rel (0) target = $region25
    $region24: #{tpu_custom_call.1} parent=1 // pred_region
      %47 = dma.done [#allocation7], 6144
    $region25: #{tpu_custom_call.1} parent=1 // pred_fallthru
      _
    // Predicated region
    $region26: #{tpu_custom_call.1} parent=1 // pred_check
      _
    $region27: #{tpu_custom_call.1} parent=1 // pred_check_branch
      %49 = sbr.rel (0) target = $region29
    $region28: #{tpu_custom_call.1} parent=1 // pred_region
      %50 = dma.done [#allocation10], 6144
    $region29: #{tpu_custom_call.1} parent=1 // pred_fallthru
      _
    %p51 = scmp.eq.s32.totalorder 0, 0
    // Predicated region
    $region30: #{tpu_custom_call.1} parent=1 // pred_check
      %p52 = pneg %p51
    $region31: #{tpu_custom_call.1} parent=1 // pred_check_branch
      %54 = sbr.rel (%p52) target = $region33
    $region32: #{tpu_custom_call.1} parent=1 // pred_region
      %55 = vst [vmem:[#allocation2] sm:$0xff] 0.0
      %56 = vst [vmem:[#allocation2 + $0x8] sm:$0xff] 0.0
      %57 = vst [vmem:[#allocation2 + $0x10] sm:$0xff] 0.0
      %58 = vst [vmem:[#allocation2 + $0x18] sm:$0xff] 0.0
      %59 = vst [vmem:[#allocation2 + $0x20] sm:$0xff] 0.0
      %60 = vst [vmem:[#allocation3] sm:$0xff] 0.0
      %61 = vst [vmem:[#allocation3 + $0x8] sm:$0xff] 0.0
      %62 = vst [vmem:[#allocation3 + $0x10] sm:$0xff] 0.0
      %63 = vst [vmem:[#allocation3 + $0x18] sm:$0xff] 0.0
      %64 = vst [vmem:[#allocation3 + $0x20] sm:$0xff] 0.0
    $region33: #{tpu_custom_call.1} parent=1 // pred_fallthru
      _
    %v65 = vld [vmem:[%s1] sm:$0x1]
    %66 = vst [vmem:[#allocation2 + $0x4] sm:$0x1] %v65
    %s67 = scalar_lea.vmem %s1, 1
    %v68 = vld [vmem:[%s67] sm:$0x1]
    %69 = vst [vmem:[#allocation2 + $0x14] sm:$0x1] %v68
    %v70 = vld [vmem:[#allocation2] sm:$0xff]
    %v71 = vld [vmem:[#allocation2 + $0x8] sm:$0xff]
    %v72 = vld [vmem:[#allocation2 + $0x10] sm:$0xff]
    %v73 = vld [vmem:[#allocation2 + $0x18] sm:$0xff]
    %v74 = vld [vmem:[#allocation6] sm:$0xff]
    %v75 = vld [vmem:[#allocation6 + $0x8] sm:$0xff]
    %v76 = vld [vmem:[#allocation6 + $0x10] sm:$0xff]
    %v77 = vld [vmem:[#allocation6 + $0x18] sm:$0xff]
    %v78 = vld [vmem:[#allocation6 + $0x20] sm:$0xff]
    %v79 = vld [vmem:[#allocation6 + $0x28] sm:$0xff]
    %v80 = vld [vmem:[#allocation6 + $0x30] sm:$0xff]
    %v81 = vld [vmem:[#allocation6 + $0x38] sm:$0xff]
    %v82 = vld [vmem:[#allocation6 + $0x40] sm:$0xff]
    %v83 = vld [vmem:[#allocation6 + $0x48] sm:$0xff]
    %v84 = vld [vmem:[#allocation6 + $0x50] sm:$0xff]
    %v85 = vld [vmem:[#allocation6 + $0x58] sm:$0xff]
    %v86 = vld [vmem:[#allocation6 + $0x60] sm:$0xff]
    %v87 = vld [vmem:[#allocation6 + $0x68] sm:$0xff]
    %v88 = vld [vmem:[#allocation6 + $0x70] sm:$0xff]
    %v89 = vld [vmem:[#allocation6 + $0x78] sm:$0xff]
    %v90 = vld [vmem:[#allocation2 + $0x2] sm:$0xff]
    %v91 = vld [vmem:[#allocation2 + $0xa] sm:$0xff]
    %v92 = vld [vmem:[#allocation2 + $0x12] sm:$0xff]
    %v93 = vld [vmem:[#allocation2 + $0x1a] sm:$0xff]
    %s94 = scalar_lea.vmem [#allocation6], 128
    %v95 = vld [vmem:[%s94] sm:$0xff]
    %v96 = vld [vmem:[%s94 + $0x8] sm:$0xff]
    %v97 = vld [vmem:[%s94 + $0x10] sm:$0xff]
    %v98 = vld [vmem:[%s94 + $0x18] sm:$0xff]
    %v99 = vld [vmem:[%s94 + $0x20] sm:$0xff]
    %v100 = vld [vmem:[%s94 + $0x28] sm:$0xff]
    %v101 = vld [vmem:[%s94 + $0x30] sm:$0xff]
    %v102 = vld [vmem:[%s94 + $0x38] sm:$0xff]
    %v103 = vld [vmem:[%s94 + $0x40] sm:$0xff]
    %v104 = vld [vmem:[%s94 + $0x48] sm:$0xff]
    %v105 = vld [vmem:[%s94 + $0x50] sm:$0xff]
    %v106 = vld [vmem:[%s94 + $0x58] sm:$0xff]
    %v107 = vld [vmem:[%s94 + $0x60] sm:$0xff]
    %v108 = vld [vmem:[%s94 + $0x68] sm:$0xff]
    %v109 = vld [vmem:[%s94 + $0x70] sm:$0xff]
    %v110 = vld [vmem:[%s94 + $0x78] sm:$0xff]
    %111 = vmatprep.subr.mxu0 0.0
    %112 = vmatpush1.msra.mxu0 %v95
    %113 = vmatprep.subr.mxu0 0.0
    %114 = vmatpush1.msra.mxu0 %v96
    %115 = vmatprep.subr.mxu0 0.0
    %116 = vmatpush1.msra.mxu0 %v97
    %117 = vmatprep.subr.mxu0 0.0
    %118 = vmatpush1.msra.mxu0 %v98
    %119 = vmatprep.subr.mxu0 0.0
    %120 = vmatpush1.msra.mxu0 %v99
    %121 = vmatprep.subr.mxu0 0.0
    %122 = vmatpush1.msra.mxu0 %v100
    %123 = vmatprep.subr.mxu0 0.0
    %124 = vmatpush1.msra.mxu0 %v101
    %125 = vmatprep.subr.mxu0 0.0
    %126 = vmatpush1.msra.mxu0 %v102
    %127 = vmatprep.subr.mxu0 0.0
    %128 = vmatpush1.msra.mxu0 %v103
    %129 = vmatprep.subr.mxu0 0.0
    %130 = vmatpush1.msra.mxu0 %v104
    %131 = vmatprep.subr.mxu0 0.0
    %132 = vmatpush1.msra.mxu0 %v105
    %133 = vmatprep.subr.mxu0 0.0
    %134 = vmatpush1.msra.mxu0 %v106
    %135 = vmatprep.subr.mxu0 0.0
    %136 = vmatpush1.msra.mxu0 %v107
    %137 = vmatprep.subr.mxu0 0.0
    %138 = vmatpush1.msra.mxu0 %v108
    %139 = vmatprep.subr.mxu0 0.0
    %140 = vmatpush1.msra.mxu0 %v109
    %141 = vmatprep.subr.mxu0 0.0
    %142 = vmatpush1.msra.mxu0 %v110
    %143 = vmatprep.subr.mxu0 0.0
    %144 = vmatpush1.msra.mxu0 0.0
    %145 = vmatprep.subr.mxu0 0.0
    %146 = vmatpush1.msra.mxu0 0.0
    %147 = vmatprep.subr.mxu0 0.0
    %148 = vmatpush1.msra.mxu0 0.0
    %149 = vmatprep.subr.mxu0 0.0
    %150 = vmatpush1.msra.mxu0 0.0
    %151 = vmatprep.subr.mxu0 0.0
    %152 = vmatpush1.msra.mxu0 0.0
    %153 = vmatprep.subr.mxu0 0.0
    %154 = vmatpush1.msra.mxu0 0.0
    %155 = vmatprep.subr.mxu0 0.0
    %156 = vmatpush1.msra.mxu0 0.0
    %157 = vmatprep.subr.mxu0 0.0
    %158 = vmatpush1.msra.mxu0 0.0
    %159 = vmatprep.subr.mxu0 0.0
    %160 = vmatpush1.msra.mxu0 0.0
    %161 = vmatprep.subr.mxu0 0.0
    %162 = vmatpush1.msra.mxu0 0.0
    %163 = vmatprep.subr.mxu0 0.0
    %164 = vmatpush1.msra.mxu0 0.0
    %165 = vmatprep.subr.mxu0 0.0
    %166 = vmatpush1.msra.mxu0 0.0
    %167 = vmatprep.subr.mxu0 0.0
    %168 = vmatpush1.msra.mxu0 0.0
    %169 = vmatprep.subr.mxu0 0.0
    %170 = vmatpush1.msra.mxu0 0.0
    %171 = vmatprep.subr.mxu0 0.0
    %172 = vmatpush1.msra.mxu0 0.0
    %173 = vmatprep.subr.mxu0 0.0
    %174 = vmatpush1.msra.mxu0 0.0
    %175 = vmatprep.mubr.f32.mxu0 0.0
    %176 = vmatmul.mubr.f32.gmra.mrb[0].mxu0 %v90
    %v177 = vpop.f32.mrb[0].mxu0
    %v178 = vadd.f32 0.0, %v177
    %v179 = vpop.f32.mrb[0].mxu0
    %180 = vmatprep.mubr.f32.mxu0 0.0
    %181 = vmatmul.mubr.f32.gmra.mrb[0].mxu0 %v91
    %v182 = vpop.f32.mrb[0].mxu0
    %v183 = vadd.f32 0.0, %v182
    %v184 = vpop.f32.mrb[0].mxu0
    %185 = vmatprep.mubr.f32.mxu0 0.0
    %186 = vmatmul.mubr.f32.gmra.mrb[0].mxu0 %v92
    %v187 = vpop.f32.mrb[0].mxu0
    %v188 = vadd.f32 0.0, %v187
    %v189 = vpop.f32.mrb[0].mxu0
    %190 = vmatprep.mubr.f32.mxu0 0.0
    %191 = vmatmul.mubr.f32.gmra.mrb[0].mxu0 %v93
    %v192 = vpop.f32.mrb[0].mxu0
    %v193 = vadd.f32 0.0, %v192
    %v194 = vpop.f32.mrb[0].mxu0
    %195 = vdwg.mxu0
    %196 = vmatprep.subr.mxu0 0.0
    %197 = vmatpush1.msra.mxu0 %v74
    %198 = vmatprep.subr.mxu0 0.0
    %199 = vmatpush1.msra.mxu0 %v75
    %200 = vmatprep.subr.mxu0 0.0
    %201 = vmatpush1.msra.mxu0 %v76
    %202 = vmatprep.subr.mxu0 0.0
    %203 = vmatpush1.msra.mxu0 %v77
    %204 = vmatprep.subr.mxu0 0.0
    %205 = vmatpush1.msra.mxu0 %v78
    %206 = vmatprep.subr.mxu0 0.0
    %207 = vmatpush1.msra.mxu0 %v79
    %208 = vmatprep.subr.mxu0 0.0
    %209 = vmatpush1.msra.mxu0 %v80
    %210 = vmatprep.subr.mxu0 0.0
    %211 = vmatpush1.msra.mxu0 %v81
    %212 = vmatprep.subr.mxu0 0.0
    %213 = vmatpush1.msra.mxu0 %v82
    %214 = vmatprep.subr.mxu0 0.0
    %215 = vmatpush1.msra.mxu0 %v83
    %216 = vmatprep.subr.mxu0 0.0
    %217 = vmatpush1.msra.mxu0 %v84
    %218 = vmatprep.subr.mxu0 0.0
    %219 = vmatpush1.msra.mxu0 %v85
    %220 = vmatprep.subr.mxu0 0.0
    %221 = vmatpush1.msra.mxu0 %v86
    %222 = vmatprep.subr.mxu0 0.0
    %223 = vmatpush1.msra.mxu0 %v87
    %224 = vmatprep.subr.mxu0 0.0
    %225 = vmatpush1.msra.mxu0 %v88
    %226 = vmatprep.subr.mxu0 0.0
    %227 = vmatpush1.msra.mxu0 %v89
    %228 = vmatprep.subr.mxu0 0.0
    %229 = vmatpush1.msra.mxu0 0.0
    %230 = vmatprep.subr.mxu0 0.0
    %231 = vmatpush1.msra.mxu0 0.0
    %232 = vmatprep.subr.mxu0 0.0
    %233 = vmatpush1.msra.mxu0 0.0
    %234 = vmatprep.subr.mxu0 0.0
    %235 = vmatpush1.msra.mxu0 0.0
    %236 = vmatprep.subr.mxu0 0.0
    %237 = vmatpush1.msra.mxu0 0.0
    %238 = vmatprep.subr.mxu0 0.0
    %239 = vmatpush1.msra.mxu0 0.0
    %240 = vmatprep.subr.mxu0 0.0
    %241 = vmatpush1.msra.mxu0 0.0
    %242 = vmatprep.subr.mxu0 0.0
    %243 = vmatpush1.msra.mxu0 0.0
    %244 = vmatprep.subr.mxu0 0.0
    %245 = vmatpush1.msra.mxu0 0.0
    %246 = vmatprep.subr.mxu0 0.0
    %247 = vmatpush1.msra.mxu0 0.0
    %248 = vmatprep.subr.mxu0 0.0
    %249 = vmatpush1.msra.mxu0 0.0
    %250 = vmatprep.subr.mxu0 0.0
    %251 = vmatpush1.msra.mxu0 0.0
    %252 = vmatprep.subr.mxu0 0.0
    %253 = vmatpush1.msra.mxu0 0.0
    %254 = vmatprep.subr.mxu0 0.0
    %255 = vmatpush1.msra.mxu0 0.0
    %256 = vmatprep.subr.mxu0 0.0
    %257 = vmatpush1.msra.mxu0 0.0
    %258 = vmatprep.subr.mxu0 0.0
    %259 = vmatpush1.msra.mxu0 0.0
    %260 = vmatprep.mubr.f32.mxu0 0.0
    %261 = vmatmul.mubr.f32.gmra.mrb[0].mxu0 %v70
    %v262 = vpop.f32.mrb[0].mxu0
    %v263 = vadd.f32 %v178, %v262
    %v264 = vpop.f32.mrb[0].mxu0
    %265 = vmatprep.mubr.f32.mxu0 0.0
    %266 = vmatmul.mubr.f32.gmra.mrb[0].mxu0 %v71
    %v267 = vpop.f32.mrb[0].mxu0
    %v268 = vadd.f32 %v183, %v267
    %v269 = vpop.f32.mrb[0].mxu0
    %270 = vmatprep.mubr.f32.mxu0 0.0
    %271 = vmatmul.mubr.f32.gmra.mrb[0].mxu0 %v72
    %v272 = vpop.f32.mrb[0].mxu0
    %v273 = vadd.f32 %v188, %v272
    %v274 = vpop.f32.mrb[0].mxu0
    %275 = vmatprep.mubr.f32.mxu0 0.0
    %276 = vmatmul.mubr.f32.gmra.mrb[0].mxu0 %v73
    %v277 = vpop.f32.mrb[0].mxu0
    %v278 = vadd.f32 %v193, %v277
    %v279 = vpop.f32.mrb[0].mxu0
    %280 = vdwg.mxu0
    %v281 = vld [vmem:[#allocation2 + $0x4] sm:$0xff]
    %v282 = vld [vmem:[#allocation2 + $0xc] sm:$0xff]
    %v283 = vld [vmem:[#allocation2 + $0x14] sm:$0xff]
    %v284 = vld [vmem:[#allocation2 + $0x1c] sm:$0xff]
    %s285 = scalar_lea.vmem [#allocation6], 256
    %v286 = vld [vmem:[%s285] sm:$0xff]
    %v287 = vld [vmem:[%s285 + $0x8] sm:$0xff]
    %v288 = vld [vmem:[%s285 + $0x10] sm:$0xff]
    %v289 = vld [vmem:[%s285 + $0x18] sm:$0xff]
    %v290 = vld [vmem:[%s285 + $0x20] sm:$0xff]
    %v291 = vld [vmem:[%s285 + $0x28] sm:$0xff]
    %v292 = vld [vmem:[%s285 + $0x30] sm:$0xff]
    %v293 = vld [vmem:[%s285 + $0x38] sm:$0xff]
    %v294 = vld [vmem:[%s285 + $0x40] sm:$0xff]
    %v295 = vld [vmem:[%s285 + $0x48] sm:$0xff]
    %v296 = vld [vmem:[%s285 + $0x50] sm:$0xff]
    %v297 = vld [vmem:[%s285 + $0x58] sm:$0xff]
    %v298 = vld [vmem:[%s285 + $0x60] sm:$0xff]
    %v299 = vld [vmem:[%s285 + $0x68] sm:$0xff]
    %v300 = vld [vmem:[%s285 + $0x70] sm:$0xff]
    %v301 = vld [vmem:[%s285 + $0x78] sm:$0xff]
    %302 = vmatprep.subr.mxu0 0.0
    %303 = vmatpush1.msra.mxu0 %v286
    %304 = vmatprep.subr.mxu0 0.0
    %305 = vmatpush1.msra.mxu0 %v287
    %306 = vmatprep.subr.mxu0 0.0
    %307 = vmatpush1.msra.mxu0 %v288
    %308 = vmatprep.subr.mxu0 0.0
    %309 = vmatpush1.msra.mxu0 %v289
    %310 = vmatprep.subr.mxu0 0.0
    %311 = vmatpush1.msra.mxu0 %v290
    %312 = vmatprep.subr.mxu0 0.0
    %313 = vmatpush1.msra.mxu0 %v291
    %314 = vmatprep.subr.mxu0 0.0
    %315 = vmatpush1.msra.mxu0 %v292
    %316 = vmatprep.subr.mxu0 0.0
    %317 = vmatpush1.msra.mxu0 %v293
    %318 = vmatprep.subr.mxu0 0.0
    %319 = vmatpush1.msra.mxu0 %v294
    %320 = vmatprep.subr.mxu0 0.0
    %321 = vmatpush1.msra.mxu0 %v295
    %322 = vmatprep.subr.mxu0 0.0
    %323 = vmatpush1.msra.mxu0 %v296
    %324 = vmatprep.subr.mxu0 0.0
    %325 = vmatpush1.msra.mxu0 %v297
    %326 = vmatprep.subr.mxu0 0.0
    %327 = vmatpush1.msra.mxu0 %v298
    %328 = vmatprep.subr.mxu0 0.0
    %329 = vmatpush1.msra.mxu0 %v299
    %330 = vmatprep.subr.mxu0 0.0
    %331 = vmatpush1.msra.mxu0 %v300
    %332 = vmatprep.subr.mxu0 0.0
    %333 = vmatpush1.msra.mxu0 %v301
    %334 = vmatprep.subr.mxu0 0.0
    %335 = vmatpush1.msra.mxu0 0.0
    %336 = vmatprep.subr.mxu0 0.0
    %337 = vmatpush1.msra.mxu0 0.0
    %338 = vmatprep.subr.mxu0 0.0
    %339 = vmatpush1.msra.mxu0 0.0
    %340 = vmatprep.subr.mxu0 0.0
    %341 = vmatpush1.msra.mxu0 0.0
    %342 = vmatprep.subr.mxu0 0.0
    %343 = vmatpush1.msra.mxu0 0.0
    %344 = vmatprep.subr.mxu0 0.0
    %345 = vmatpush1.msra.mxu0 0.0
    %346 = vmatprep.subr.mxu0 0.0
    %347 = vmatpush1.msra.mxu0 0.0
    %348 = vmatprep.subr.mxu0 0.0
    %349 = vmatpush1.msra.mxu0 0.0
    %350 = vmatprep.subr.mxu0 0.0
    %351 = vmatpush1.msra.mxu0 0.0
    %352 = vmatprep.subr.mxu0 0.0
    %353 = vmatpush1.msra.mxu0 0.0
    %354 = vmatprep.subr.mxu0 0.0
    %355 = vmatpush1.msra.mxu0 0.0
    %356 = vmatprep.subr.mxu0 0.0
    %357 = vmatpush1.msra.mxu0 0.0
    %358 = vmatprep.subr.mxu0 0.0
    %359 = vmatpush1.msra.mxu0 0.0
    %360 = vmatprep.subr.mxu0 0.0
    %361 = vmatpush1.msra.mxu0 0.0
    %362 = vmatprep.subr.mxu0 0.0
    %363 = vmatpush1.msra.mxu0 0.0
    %364 = vmatprep.subr.mxu0 0.0
    %365 = vmatpush1.msra.mxu0 0.0
    %366 = vmatprep.mubr.f32.mxu0 0.0
    %367 = vmatmul.mubr.f32.gmra.mrb[0].mxu0 %v281
    %v368 = vpop.f32.mrb[0].mxu0
    %v369 = vadd.f32 0.0, %v368
    %v370 = vpop.f32.mrb[0].mxu0
    %371 = vmatprep.mubr.f32.mxu0 0.0
    %372 = vmatmul.mubr.f32.gmra.mrb[0].mxu0 %v282
    %v373 = vpop.f32.mrb[0].mxu0
    %v374 = vadd.f32 0.0, %v373
    %v375 = vpop.f32.mrb[0].mxu0
    %376 = vmatprep.mubr.f32.mxu0 0.0
    %377 = vmatmul.mubr.f32.gmra.mrb[0].mxu0 %v283
    %v378 = vpop.f32.mrb[0].mxu0
    %v379 = vadd.f32 0.0, %v378
    %v380 = vpop.f32.mrb[0].mxu0
    %381 = vmatprep.mubr.f32.mxu0 0.0
    %382 = vmatmul.mubr.f32.gmra.mrb[0].mxu0 %v284
    %v383 = vpop.f32.mrb[0].mxu0
    %v384 = vadd.f32 0.0, %v383
    %v385 = vpop.f32.mrb[0].mxu0
    %386 = vdwg.mxu0
    %v387 = vadd.f32 %v263, %v369
    %v388 = vadd.f32 %v268, %v374
    %v389 = vadd.f32 %v273, %v379
    %v390 = vadd.f32 %v278, %v384
    %v391 = vld [vmem:[%s3] sm:$0x1]
    %v393 = vlaneseq
    %v394 = vshrl.u32 %v393, 7
    %v395 = vsub.s32 0, %v394
    %v396 = vrot.slane %v391, %v395
    %v398 = vadd.f32 %v387, %v396
    %v399 = vadd.f32 %v388, %v396
    %v400 = vadd.f32 %v389, %v396
    %v401 = vadd.f32 %v390, %v396
    %v402 = vmax.f32 %v398, 0.0
    %v403 = vmax.f32 %v399, 0.0
    %v404 = vmax.f32 %v400, 0.0
    %v405 = vmax.f32 %v401, 0.0
    %v406 = vlaneseq
    %v407 = vshrl.u32 %v406, 7
    %v408 = vadd.s32 %v407, 8
    %v409 = vadd.s32 %v407, 16
    %v410 = vadd.s32 %v407, 24
    %vm411 = vcmp.lt.s32.totalorder %v407, 0
    %v412 = vsub.s32 0, %v407
    %v413 = vsel %vm411, %v412, %v407
    %v414 = vshrl.u32 %v413, 4
    %v415 = vand.u32 %v413, 15
    %v416 = vsub.s32 0, %v415
    %v417 = vsel %vm411, %v416, %v415
    %vm418 = vcmp.lt.s32.totalorder %v408, 0
    %v419 = vsub.s32 0, %v408
    %v420 = vsel %vm418, %v419, %v408
    %v421 = vshrl.u32 %v420, 4
    %v422 = vand.u32 %v420, 15
    %v423 = vsub.s32 0, %v422
    %v424 = vsel %vm418, %v423, %v422
    %vm425 = vcmp.lt.s32.totalorder %v409, 0
    %v426 = vsub.s32 0, %v409
    %v427 = vsel %vm425, %v426, %v409
    %v428 = vshrl.u32 %v427, 4
    %v429 = vand.u32 %v427, 15
    %v430 = vsub.s32 0, %v429
    %v431 = vsel %vm425, %v430, %v429
    %vm432 = vcmp.lt.s32.totalorder %v410, 0
    %v433 = vsub.s32 0, %v410
    %v434 = vsel %vm432, %v433, %v410
    %v435 = vshrl.u32 %v434, 4
    %v436 = vand.u32 %v434, 15
    %v437 = vsub.s32 0, %v436
    %v438 = vsel %vm432, %v437, %v436
    %vm439 = vcmp.ne.s32.totalorder %v417, 0
    %vm440 = vcmp.ne.s32.totalorder %v424, 0
    %vm441 = vcmp.ne.s32.totalorder %v431, 0
    %vm442 = vcmp.ne.s32.totalorder %v438, 0
    %vm443 = vcmp.lt.s32.totalorder %v417, 0
    %vm444 = vcmp.lt.s32.totalorder %v424, 0
    %vm445 = vcmp.lt.s32.totalorder %v431, 0
    %vm446 = vcmp.lt.s32.totalorder %v438, 0
    %vm447 = vmand %vm443, %vm439
    %vm448 = vmand %vm444, %vm440
    %vm449 = vmand %vm445, %vm441
    %vm450 = vmand %vm446, %vm442
    %v451 = vadd.s32 %v417, 16
    %v452 = vadd.s32 %v424, 16
    %v453 = vadd.s32 %v431, 16
    %v454 = vadd.s32 %v438, 16
    %v455 = vsel %vm447, %v451, %v417
    %v456 = vsel %vm448, %v452, %v424
    %v457 = vsel %vm449, %v453, %v431
    %v458 = vsel %vm450, %v454, %v438
    %vm459 = vcmp.lt.s32.totalorder %v455, 5
    %vm460 = vcmp.lt.s32.totalorder %v456, 5
    %vm461 = vcmp.lt.s32.totalorder %v457, 5
    %vm462 = vcmp.lt.s32.totalorder %v458, 5
    %v463 = vsel %vm459, 1, 0
    %v464 = vsel %vm460, 1, 0
    %v465 = vsel %vm461, 1, 0
    %v466 = vsel %vm462, 1, 0
    %vm467 = vcmp.eq.s32.totalorder %v463, 1
    %vm468 = vcmp.eq.s32.totalorder %v464, 1
    %vm469 = vcmp.eq.s32.totalorder %v465, 1
    %vm470 = vcmp.eq.s32.totalorder %v466, 1
    %v471 = vsel %vm467, %v402, 0.0
    %v472 = vsel %vm468, %v403, 0.0
    %v473 = vsel %vm469, %v404, 0.0
    %v474 = vsel %vm470, %v405, 0.0
    %475 = vst [vmem:[#allocation3 + $0x8] sm:$0xff] %v471
    %476 = vst [vmem:[#allocation3 + $0x10] sm:$0xff] %v472
    %477 = vst [vmem:[#allocation3 + $0x18] sm:$0xff] %v473
    %478 = vst [vmem:[#allocation3 + $0x20] sm:$0xff] %v474
    %v479 = vld [vmem:[#allocation3 + $0x4] sm:$0xff]
    %v480 = vld [vmem:[#allocation3 + $0xc] sm:$0xff]
    %v481 = vld [vmem:[#allocation3 + $0x14] sm:$0xff]
    %v482 = vld [vmem:[#allocation3 + $0x1c] sm:$0xff]
    %v483 = vld [vmem:[#allocation9] sm:$0xff]
    %v484 = vld [vmem:[#allocation9 + $0x8] sm:$0xff]
    %v485 = vld [vmem:[#allocation9 + $0x10] sm:$0xff]
    %v486 = vld [vmem:[#allocation9 + $0x18] sm:$0xff]
    %v487 = vld [vmem:[#allocation9 + $0x20] sm:$0xff]
    %v488 = vld [vmem:[#allocation9 + $0x28] sm:$0xff]
    %v489 = vld [vmem:[#allocation9 + $0x30] sm:$0xff]
    %v490 = vld [vmem:[#allocation9 + $0x38] sm:$0xff]
    %v491 = vld [vmem:[#allocation9 + $0x40] sm:$0xff]
    %v492 = vld [vmem:[#allocation9 + $0x48] sm:$0xff]
    %v493 = vld [vmem:[#allocation9 + $0x50] sm:$0xff]
    %v494 = vld [vmem:[#allocation9 + $0x58] sm:$0xff]
    %v495 = vld [vmem:[#allocation9 + $0x60] sm:$0xff]
    %v496 = vld [vmem:[#allocation9 + $0x68] sm:$0xff]
    %v497 = vld [vmem:[#allocation9 + $0x70] sm:$0xff]
    %v498 = vld [vmem:[#allocation9 + $0x78] sm:$0xff]
    %v499 = vld [vmem:[#allocation3 + $0x6] sm:$0xff]
    %v500 = vld [vmem:[#allocation3 + $0xe] sm:$0xff]
    %v501 = vld [vmem:[#allocation3 + $0x16] sm:$0xff]
    %v502 = vld [vmem:[#allocation3 + $0x1e] sm:$0xff]
    %s503 = scalar_lea.vmem [#allocation9], 128
    %v504 = vld [vmem:[%s503] sm:$0xff]
    %v505 = vld [vmem:[%s503 + $0x8] sm:$0xff]
    %v506 = vld [vmem:[%s503 + $0x10] sm:$0xff]
    %v507 = vld [vmem:[%s503 + $0x18] sm:$0xff]
    %v508 = vld [vmem:[%s503 + $0x20] sm:$0xff]
    %v509 = vld [vmem:[%s503 + $0x28] sm:$0xff]
    %v510 = vld [vmem:[%s503 + $0x30] sm:$0xff]
    %v511 = vld [vmem:[%s503 + $0x38] sm:$0xff]
    %v512 = vld [vmem:[%s503 + $0x40] sm:$0xff]
    %v513 = vld [vmem:[%s503 + $0x48] sm:$0xff]
    %v514 = vld [vmem:[%s503 + $0x50] sm:$0xff]
    %v515 = vld [vmem:[%s503 + $0x58] sm:$0xff]
    %v516 = vld [vmem:[%s503 + $0x60] sm:$0xff]
    %v517 = vld [vmem:[%s503 + $0x68] sm:$0xff]
    %v518 = vld [vmem:[%s503 + $0x70] sm:$0xff]
    %v519 = vld [vmem:[%s503 + $0x78] sm:$0xff]
    %520 = vmatprep.subr.mxu0 0.0
    %521 = vmatpush1.msra.mxu0 %v504
    %522 = vmatprep.subr.mxu0 0.0
    %523 = vmatpush1.msra.mxu0 %v505
    %524 = vmatprep.subr.mxu0 0.0
    %525 = vmatpush1.msra.mxu0 %v506
    %526 = vmatprep.subr.mxu0 0.0
    %527 = vmatpush1.msra.mxu0 %v507
    %528 = vmatprep.subr.mxu0 0.0
    %529 = vmatpush1.msra.mxu0 %v508
    %530 = vmatprep.subr.mxu0 0.0
    %531 = vmatpush1.msra.mxu0 %v509
    %532 = vmatprep.subr.mxu0 0.0
    %533 = vmatpush1.msra.mxu0 %v510
    %534 = vmatprep.subr.mxu0 0.0
    %535 = vmatpush1.msra.mxu0 %v511
    %536 = vmatprep.subr.mxu0 0.0
    %537 = vmatpush1.msra.mxu0 %v512
    %538 = vmatprep.subr.mxu0 0.0
    %539 = vmatpush1.msra.mxu0 %v513
    %540 = vmatprep.subr.mxu0 0.0
    %541 = vmatpush1.msra.mxu0 %v514
    %542 = vmatprep.subr.mxu0 0.0
    %543 = vmatpush1.msra.mxu0 %v515
    %544 = vmatprep.subr.mxu0 0.0
    %545 = vmatpush1.msra.mxu0 %v516
    %546 = vmatprep.subr.mxu0 0.0
    %547 = vmatpush1.msra.mxu0 %v517
    %548 = vmatprep.subr.mxu0 0.0
    %549 = vmatpush1.msra.mxu0 %v518
    %550 = vmatprep.subr.mxu0 0.0
    %551 = vmatpush1.msra.mxu0 %v519
    %552 = vmatprep.subr.mxu0 0.0
    %553 = vmatpush1.msra.mxu0 0.0
    %554 = vmatprep.subr.mxu0 0.0
    %555 = vmatpush1.msra.mxu0 0.0
    %556 = vmatprep.subr.mxu0 0.0
    %557 = vmatpush1.msra.mxu0 0.0
    %558 = vmatprep.subr.mxu0 0.0
    %559 = vmatpush1.msra.mxu0 0.0
    %560 = vmatprep.subr.mxu0 0.0
    %561 = vmatpush1.msra.mxu0 0.0
    %562 = vmatprep.subr.mxu0 0.0
    %563 = vmatpush1.msra.mxu0 0.0
    %564 = vmatprep.subr.mxu0 0.0
    %565 = vmatpush1.msra.mxu0 0.0
    %566 = vmatprep.subr.mxu0 0.0
    %567 = vmatpush1.msra.mxu0 0.0
    %568 = vmatprep.subr.mxu0 0.0
    %569 = vmatpush1.msra.mxu0 0.0
    %570 = vmatprep.subr.mxu0 0.0
    %571 = vmatpush1.msra.mxu0 0.0
    %572 = vmatprep.subr.mxu0 0.0
    %573 = vmatpush1.msra.mxu0 0.0
    %574 = vmatprep.subr.mxu0 0.0
    %575 = vmatpush1.msra.mxu0 0.0
    %576 = vmatprep.subr.mxu0 0.0
    %577 = vmatpush1.msra.mxu0 0.0
    %578 = vmatprep.subr.mxu0 0.0
    %579 = vmatpush1.msra.mxu0 0.0
    %580 = vmatprep.subr.mxu0 0.0
    %581 = vmatpush1.msra.mxu0 0.0
    %582 = vmatprep.subr.mxu0 0.0
    %583 = vmatpush1.msra.mxu0 0.0
    %584 = vmatprep.mubr.f32.mxu0 0.0
    %585 = vmatmul.mubr.f32.gmra.mrb[0].mxu0 %v499
    %v586 = vpop.f32.mrb[0].mxu0
    %v587 = vadd.f32 0.0, %v586
    %v588 = vpop.f32.mrb[0].mxu0
    %589 = vmatprep.mubr.f32.mxu0 0.0
    %590 = vmatmul.mubr.f32.gmra.mrb[0].mxu0 %v500
    %v591 = vpop.f32.mrb[0].mxu0
    %v592 = vadd.f32 0.0, %v591
    %v593 = vpop.f32.mrb[0].mxu0
    %594 = vmatprep.mubr.f32.mxu0 0.0
    %595 = vmatmul.mubr.f32.gmra.mrb[0].mxu0 %v501
    %v596 = vpop.f32.mrb[0].mxu0
    %v597 = vadd.f32 0.0, %v596
    %v598 = vpop.f32.mrb[0].mxu0
    %599 = vmatprep.mubr.f32.mxu0 0.0
    %600 = vmatmul.mubr.f32.gmra.mrb[0].mxu0 %v502
    %v601 = vpop.f32.mrb[0].mxu0
    %v602 = vadd.f32 0.0, %v601
    %v603 = vpop.f32.mrb[0].mxu0
    %604 = vdwg.mxu0
    %605 = vmatprep.subr.mxu0 0.0
    %606 = vmatpush1.msra.mxu0 %v483
    %607 = vmatprep.subr.mxu0 0.0
    %608 = vmatpush1.msra.mxu0 %v484
    %609 = vmatprep.subr.mxu0 0.0
    %610 = vmatpush1.msra.mxu0 %v485
    %611 = vmatprep.subr.mxu0 0.0
    %612 = vmatpush1.msra.mxu0 %v486
    %613 = vmatprep.subr.mxu0 0.0
    %614 = vmatpush1.msra.mxu0 %v487
    %615 = vmatprep.subr.mxu0 0.0
    %616 = vmatpush1.msra.mxu0 %v488
    %617 = vmatprep.subr.mxu0 0.0
    %618 = vmatpush1.msra.mxu0 %v489
    %619 = vmatprep.subr.mxu0 0.0
    %620 = vmatpush1.msra.mxu0 %v490
    %621 = vmatprep.subr.mxu0 0.0
    %622 = vmatpush1.msra.mxu0 %v491
    %623 = vmatprep.subr.mxu0 0.0
    %624 = vmatpush1.msra.mxu0 %v492
    %625 = vmatprep.subr.mxu0 0.0
    %626 = vmatpush1.msra.mxu0 %v493
    %627 = vmatprep.subr.mxu0 0.0
    %628 = vmatpush1.msra.mxu0 %v494
    %629 = vmatprep.subr.mxu0 0.0
    %630 = vmatpush1.msra.mxu0 %v495
    %631 = vmatprep.subr.mxu0 0.0
    %632 = vmatpush1.msra.mxu0 %v496
    %633 = vmatprep.subr.mxu0 0.0
    %634 = vmatpush1.msra.mxu0 %v497
    %635 = vmatprep.subr.mxu0 0.0
    %636 = vmatpush1.msra.mxu0 %v498
    %637 = vmatprep.subr.mxu0 0.0
    %638 = vmatpush1.msra.mxu0 0.0
    %639 = vmatprep.subr.mxu0 0.0
    %640 = vmatpush1.msra.mxu0 0.0
    %641 = vmatprep.subr.mxu0 0.0
    %642 = vmatpush1.msra.mxu0 0.0
    %643 = vmatprep.subr.mxu0 0.0
    %644 = vmatpush1.msra.mxu0 0.0
    %645 = vmatprep.subr.mxu0 0.0
    %646 = vmatpush1.msra.mxu0 0.0
    %647 = vmatprep.subr.mxu0 0.0
    %648 = vmatpush1.msra.mxu0 0.0
    %649 = vmatprep.subr.mxu0 0.0
    %650 = vmatpush1.msra.mxu0 0.0
    %651 = vmatprep.subr.mxu0 0.0
    %652 = vmatpush1.msra.mxu0 0.0
    %653 = vmatprep.subr.mxu0 0.0
    %654 = vmatpush1.msra.mxu0 0.0
    %655 = vmatprep.subr.mxu0 0.0
    %656 = vmatpush1.msra.mxu0 0.0
    %657 = vmatprep.subr.mxu0 0.0
    %658 = vmatpush1.msra.mxu0 0.0
    %659 = vmatprep.subr.mxu0 0.0
    %660 = vmatpush1.msra.mxu0 0.0
    %661 = vmatprep.subr.mxu0 0.0
    %662 = vmatpush1.msra.mxu0 0.0
    %663 = vmatprep.subr.mxu0 0.0
    %664 = vmatpush1.msra.mxu0 0.0
    %665 = vmatprep.subr.mxu0 0.0
    %666 = vmatpush1.msra.mxu0 0.0
    %667 = vmatprep.subr.mxu0 0.0
    %668 = vmatpush1.msra.mxu0 0.0
    %669 = vmatprep.mubr.f32.mxu0 0.0
    %670 = vmatmul.mubr.f32.gmra.mrb[0].mxu0 %v479
    %v671 = vpop.f32.mrb[0].mxu0
    %v672 = vadd.f32 %v587, %v671
    %v673 = vpop.f32.mrb[0].mxu0
    %674 = vmatprep.mubr.f32.mxu0 0.0
    %675 = vmatmul.mubr.f32.gmra.mrb[0].mxu0 %v480
    %v676 = vpop.f32.mrb[0].mxu0
    %v677 = vadd.f32 %v592, %v676
    %v678 = vpop.f32.mrb[0].mxu0
    %679 = vmatprep.mubr.f32.mxu0 0.0
    %680 = vmatmul.mubr.f32.gmra.mrb[0].mxu0 %v481
    %v681 = vpop.f32.mrb[0].mxu0
    %v682 = vadd.f32 %v597, %v681
    %v683 = vpop.f32.mrb[0].mxu0
    %684 = vmatprep.mubr.f32.mxu0 0.0
    %685 = vmatmul.mubr.f32.gmra.mrb[0].mxu0 %v482
    %v686 = vpop.f32.mrb[0].mxu0
    %v687 = vadd.f32 %v602, %v686
    %v688 = vpop.f32.mrb[0].mxu0
    %689 = vdwg.mxu0
    %v690 = vld [vmem:[#allocation3 + $0x8] sm:$0xff]
    %v691 = vld [vmem:[#allocation3 + $0x10] sm:$0xff]
    %v692 = vld [vmem:[#allocation3 + $0x18] sm:$0xff]
    %v693 = vld [vmem:[#allocation3 + $0x20] sm:$0xff]
    %s694 = scalar_lea.vmem [#allocation9], 256
    %v695 = vld [vmem:[%s694] sm:$0xff]
    %v696 = vld [vmem:[%s694 + $0x8] sm:$0xff]
    %v697 = vld [vmem:[%s694 + $0x10] sm:$0xff]
    %v698 = vld [vmem:[%s694 + $0x18] sm:$0xff]
    %v699 = vld [vmem:[%s694 + $0x20] sm:$0xff]
    %v700 = vld [vmem:[%s694 + $0x28] sm:$0xff]
    %v701 = vld [vmem:[%s694 + $0x30] sm:$0xff]
    %v702 = vld [vmem:[%s694 + $0x38] sm:$0xff]
    %v703 = vld [vmem:[%s694 + $0x40] sm:$0xff]
    %v704 = vld [vmem:[%s694 + $0x48] sm:$0xff]
    %v705 = vld [vmem:[%s694 + $0x50] sm:$0xff]
    %v706 = vld [vmem:[%s694 + $0x58] sm:$0xff]
    %v707 = vld [vmem:[%s694 + $0x60] sm:$0xff]
    %v708 = vld [vmem:[%s694 + $0x68] sm:$0xff]
    %v709 = vld [vmem:[%s694 + $0x70] sm:$0xff]
    %v710 = vld [vmem:[%s694 + $0x78] sm:$0xff]
    %711 = vmatprep.subr.mxu0 0.0
    %712 = vmatpush1.msra.mxu0 %v695
    %713 = vmatprep.subr.mxu0 0.0
    %714 = vmatpush1.msra.mxu0 %v696
    %715 = vmatprep.subr.mxu0 0.0
    %716 = vmatpush1.msra.mxu0 %v697
    %717 = vmatprep.subr.mxu0 0.0
    %718 = vmatpush1.msra.mxu0 %v698
    %719 = vmatprep.subr.mxu0 0.0
    %720 = vmatpush1.msra.mxu0 %v699
    %721 = vmatprep.subr.mxu0 0.0
    %722 = vmatpush1.msra.mxu0 %v700
    %723 = vmatprep.subr.mxu0 0.0
    %724 = vmatpush1.msra.mxu0 %v701
    %725 = vmatprep.subr.mxu0 0.0
    %726 = vmatpush1.msra.mxu0 %v702
    %727 = vmatprep.subr.mxu0 0.0
    %728 = vmatpush1.msra.mxu0 %v703
    %729 = vmatprep.subr.mxu0 0.0
    %730 = vmatpush1.msra.mxu0 %v704
    %731 = vmatprep.subr.mxu0 0.0
    %732 = vmatpush1.msra.mxu0 %v705
    %733 = vmatprep.subr.mxu0 0.0
    %734 = vmatpush1.msra.mxu0 %v706
    %735 = vmatprep.subr.mxu0 0.0
    %736 = vmatpush1.msra.mxu0 %v707
    %737 = vmatprep.subr.mxu0 0.0
    %738 = vmatpush1.msra.mxu0 %v708
    %739 = vmatprep.subr.mxu0 0.0
    %740 = vmatpush1.msra.mxu0 %v709
    %741 = vmatprep.subr.mxu0 0.0
    %742 = vmatpush1.msra.mxu0 %v710
    %743 = vmatprep.subr.mxu0 0.0
    %744 = vmatpush1.msra.mxu0 0.0
    %745 = vmatprep.subr.mxu0 0.0
    %746 = vmatpush1.msra.mxu0 0.0
    %747 = vmatprep.subr.mxu0 0.0
    %748 = vmatpush1.msra.mxu0 0.0
    %749 = vmatprep.subr.mxu0 0.0
    %750 = vmatpush1.msra.mxu0 0.0
    %751 = vmatprep.subr.mxu0 0.0
    %752 = vmatpush1.msra.mxu0 0.0
    %753 = vmatprep.subr.mxu0 0.0
    %754 = vmatpush1.msra.mxu0 0.0
    %755 = vmatprep.subr.mxu0 0.0
    %756 = vmatpush1.msra.mxu0 0.0
    %757 = vmatprep.subr.mxu0 0.0
    %758 = vmatpush1.msra.mxu0 0.0
    %759 = vmatprep.subr.mxu0 0.0
    %760 = vmatpush1.msra.mxu0 0.0
    %761 = vmatprep.subr.mxu0 0.0
    %762 = vmatpush1.msra.mxu0 0.0
    %763 = vmatprep.subr.mxu0 0.0
    %764 = vmatpush1.msra.mxu0 0.0
    %765 = vmatprep.subr.mxu0 0.0
    %766 = vmatpush1.msra.mxu0 0.0
    %767 = vmatprep.subr.mxu0 0.0
    %768 = vmatpush1.msra.mxu0 0.0
    %769 = vmatprep.subr.mxu0 0.0
    %770 = vmatpush1.msra.mxu0 0.0
    %771 = vmatprep.subr.mxu0 0.0
    %772 = vmatpush1.msra.mxu0 0.0
    %773 = vmatprep.subr.mxu0 0.0
    %774 = vmatpush1.msra.mxu0 0.0
    %775 = vmatprep.mubr.f32.mxu0 0.0
    %776 = vmatmul.mubr.f32.gmra.mrb[0].mxu0 %v690
    %v777 = vpop.f32.mrb[0].mxu0
    %v778 = vadd.f32 0.0, %v777
    %v779 = vpop.f32.mrb[0].mxu0
    %780 = vmatprep.mubr.f32.mxu0 0.0
    %781 = vmatmul.mubr.f32.gmra.mrb[0].mxu0 %v691
    %v782 = vpop.f32.mrb[0].mxu0
    %v783 = vadd.f32 0.0, %v782
    %v784 = vpop.f32.mrb[0].mxu0
    %785 = vmatprep.mubr.f32.mxu0 0.0
    %786 = vmatmul.mubr.f32.gmra.mrb[0].mxu0 %v692
    %v787 = vpop.f32.mrb[0].mxu0
    %v788 = vadd.f32 0.0, %v787
    %v789 = vpop.f32.mrb[0].mxu0
    %790 = vmatprep.mubr.f32.mxu0 0.0
    %791 = vmatmul.mubr.f32.gmra.mrb[0].mxu0 %v693
    %v792 = vpop.f32.mrb[0].mxu0
    %v793 = vadd.f32 0.0, %v792
    %v794 = vpop.f32.mrb[0].mxu0
    %795 = vdwg.mxu0
    %v796 = vadd.f32 %v672, %v778
    %v797 = vadd.f32 %v677, %v783
    %v798 = vadd.f32 %v682, %v788
    %v799 = vadd.f32 %v687, %v793
    %v800 = vld [vmem:[%s5] sm:$0x1]
    %v802 = vlaneseq
    %v803 = vshrl.u32 %v802, 7
    %v804 = vsub.s32 0, %v803
    %v805 = vrot.slane %v800, %v804
    %v807 = vadd.f32 %v796, %v805
    %v808 = vadd.f32 %v797, %v805
    %v809 = vadd.f32 %v798, %v805
    %v810 = vadd.f32 %v799, %v805
    %v811 = vld [vmem:[%s1] sm:$0x1]
    %v812 = vld [vmem:[%s1 + $0x1] sm:$0x1]
    %v815 = vlaneseq
    %v816 = vshrl.u32 %v815, 7
    %v817 = vsub.s32 0, %v816
    %v818 = vrot.slane %v811, %v817
    %v819 = vlaneseq
    %v820 = vshrl.u32 %v819, 7
    %v821 = vsub.s32 0, %v820
    %v822 = vrot.slane %v812, %v821
    %v825 = vadd.f32 %v807, %v818
    %v826 = vadd.f32 %v808, %v818
    %v827 = vadd.f32 %v809, %v822
    %v828 = vadd.f32 %v810, %v822
    %v829 = vmax.f32 %v825, 0.0
    %v830 = vmax.f32 %v826, 0.0
    %v831 = vmax.f32 %v827, 0.0
    %v832 = vmax.f32 %v828, 0.0
    %833 = vst [vmem:[#allocation11] sm:$0xff] %v829
    %834 = vst [vmem:[#allocation11 + $0x8] sm:$0xff] %v830
    %835 = vst [vmem:[#allocation11 + $0x10] sm:$0xff] %v831
    %836 = vst [vmem:[#allocation11 + $0x18] sm:$0xff] %v832
    // Predicated region
    $region34: #{tpu_custom_call.1} parent=1 // pred_check
      _
    $region35: #{tpu_custom_call.1} parent=1 // pred_check_branch
      %838 = sbr.rel (0) target = $region37
    $region36: #{tpu_custom_call.1} parent=1 // pred_region
      %s840 = ssub.s32 512, 512
      %841 = vsyncadd [#allocation8], %s840
      %s842 = sshll.u32 [#allocation11], 4
      %s843 = int_to_ptr.vmem [resolvable:$true] %s842
      %848 = dma.vmem_to_hbm [thread:$0]  %s843, 512, %s6, [#allocation8], 128, 128, 8
    $region37: #{tpu_custom_call.1} parent=1 // pred_fallthru
      _
    // Predicated region
    $region38: #{tpu_custom_call.1} parent=1 // pred_check
      _
    $region39: #{tpu_custom_call.1} parent=1 // pred_check_branch
      %850 = sbr.rel (0) target = $region41
    $region40: #{tpu_custom_call.1} parent=1 // pred_region
      %851 = dma.done [#allocation8], 512
    $region41: #{tpu_custom_call.1} parent=1 // pred_fallthru
      _
    %852 = vsyncpa [#allocation7], 1
    %853 = vsyncpa [#allocation10], 1
    %854 = vsyncpa [#allocation8], 1

</llo_original>
